<compile_context>
chip_gen: v6e
topology: v6e:2x2x1
jax: 0.10.0
libtpu: 0.0.40
codegen_flags: <defaults>
</compile_context>

<pallas_src>
import functools
import math

import jax
import jax.numpy as jnp
from jax.experimental import pallas as pl
from jax.experimental.pallas import tpu as pltpu

# Conservative VMEM budgets so a single config is safe across v5e/v6e
# (128 MiB physical) and v7x (64 MiB physical).
_VMEM_LIMIT_BYTES = 56 * 1024 * 1024   # scoped limit passed to the compiler
_VMEM_TILE_BUDGET = 40 * 1024 * 1024   # double-buffered x/w/out tiles, f32 est.


def _round_up(x, m):
    return (x + m - 1) // m * m


def _pick_tile(dim, align, max_tile):
    """Largest multiple of `align` <= max_tile that evenly divides
    round_up(dim, align), so padding never exceeds align - 1 elements."""
    padded = _round_up(dim, align)
    best = align
    t = align
    limit = min(max_tile, padded)
    while t <= limit:
        if padded % t == 0:
            best = t
        t += align
    return best


def _conv1d_fullk_kernel(x_ref, w_ref, b_ref, o_ref):
    """One (tm, tn) output tile; the full contraction (nx) is resident in VMEM."""
    acc = jnp.dot(x_ref[...], w_ref[...], preferred_element_type=jnp.float32)
    o_ref[...] = (acc + b_ref[...].astype(jnp.float32)).astype(o_ref.dtype)


def _conv1d_ktiled_kernel(x_ref, w_ref, b_ref, o_ref, acc_ref):
    """Fallback: (tm, tn) output tile reduced over the (last) K grid axis.
    Bias is folded into the accumulator init; the epilogue is a pure cast."""
    k = pl.program_id(2)

    @pl.when(k == 0)
    def _():
        acc_ref[...] = jnp.broadcast_to(
            b_ref[...].astype(jnp.float32), acc_ref.shape)

    acc_ref[...] += jnp.dot(
        x_ref[...], w_ref[...], preferred_element_type=jnp.float32)

    @pl.when(k == pl.num_programs(2) - 1)
    def _():
        o_ref[...] = acc_ref[...].astype(o_ref.dtype)


@functools.partial(jax.jit, static_argnames=("compute_dtype", "force_ktiled"))
def frozen_conv1d(x, weight, bias=None, *, compute_dtype=None,
                  force_ktiled=False):
    """out = x @ weight + bias over the last axis of x (GPT-2 Conv1D forward)."""
    nx, nf = weight.shape
    assert x.shape[-1] == nx
    lead = x.shape[:-1]
    m = math.prod(lead)
    out_dtype = x.dtype

    if bias is None:
        bias = jnp.zeros((nf,), dtype=weight.dtype)

    # Optional low-precision compute for the frozen weight path; default None
    # preserves the module's exact f32 addmm semantics.
    if compute_dtype is not None:
        x = x.astype(compute_dtype)
        weight = weight.astype(compute_dtype)

    x2 = x.reshape(m, nx)
    w2 = weight
    b2 = bias.reshape(1, nf)

    # MXU-sized tiles (multiples of 128 suit v5e's 4x128 and v6e/v7x's 2x256
    # MXUs); padding instead of hard divisibility asserts.
    tm = _pick_tile(m, 8, 512)
    tn = _pick_tile(nf, 128, 512)
    m_pad = _round_up(m, tm)
    nf_pad = _round_up(nf, tn)

    if m_pad != m:
        x2 = jnp.pad(x2, ((0, m_pad - m), (0, 0)))
    if nf_pad != nf:
        w2 = jnp.pad(w2, ((0, 0), (0, nf_pad - nf)))
        b2 = jnp.pad(b2, ((0, 0), (0, nf_pad - nf)))

    # Advisory cost hint for XLA's scheduler around the custom call.
    elt = 4 if compute_dtype is None else jnp.dtype(compute_dtype).itemsize
    cost = pl.CostEstimate(
        flops=2 * m_pad * nx * nf_pad,
        transcendentals=0,
        bytes_accessed=(m_pad * nx + nx * nf_pad) * elt
                       + m_pad * nf_pad * jnp.dtype(out_dtype).itemsize,
    )

    # Prefer the no-K-grid-axis path: whole-nx strips in VMEM, no accumulator
    # scratch, one grid step per output tile.  Conservative f32 double-buffered
    # estimate keeps v7x's 64 MiB VMEM safe; fall back to K-tiling otherwise.
    fullk_bytes = 2 * (tm * nx + nx * tn + tm * tn) * 4
    use_fullk = (fullk_bytes <= _VMEM_TILE_BUDGET) and not force_ktiled

    compiler_params = pltpu.CompilerParams(
        dimension_semantics=(("parallel", "parallel") if use_fullk
                             else ("parallel", "parallel", "arbitrary")),
        vmem_limit_bytes=_VMEM_LIMIT_BYTES,
    )

    if use_fullk:
        grid = (m_pad // tm, nf_pad // tn)
        out2 = pl.pallas_call(
            _conv1d_fullk_kernel,
            out_shape=jax.ShapeDtypeStruct((m_pad, nf_pad), out_dtype),
            grid_spec=pltpu.PrefetchScalarGridSpec(
                num_scalar_prefetch=0,
                grid=grid,
                in_specs=[
                    pl.BlockSpec((tm, nx), lambda i, j: (i, 0)),   # x strip
                    pl.BlockSpec((nx, tn), lambda i, j: (0, j)),   # weight strip
                    pl.BlockSpec((1, tn), lambda i, j: (0, j)),    # bias tile
                ],
                out_specs=pl.BlockSpec((tm, tn), lambda i, j: (i, j)),
            ),
            compiler_params=compiler_params,
            cost_estimate=cost,
        )(x2, w2, b2)
    else:
        tk = _pick_tile(nx, 128, 512)
        nx_pad = _round_up(nx, tk)
        if nx_pad != nx:
            x2 = jnp.pad(x2, ((0, 0), (0, nx_pad - nx)))
            w2 = jnp.pad(w2, ((0, nx_pad - nx), (0, 0)))
        grid = (m_pad // tm, nf_pad // tn, nx_pad // tk)
        out2 = pl.pallas_call(
            _conv1d_ktiled_kernel,
            out_shape=jax.ShapeDtypeStruct((m_pad, nf_pad), out_dtype),
            grid_spec=pltpu.PrefetchScalarGridSpec(
                num_scalar_prefetch=0,
                grid=grid,
                in_specs=[
                    pl.BlockSpec((tm, tk), lambda i, j, k: (i, k)),   # x tile
                    pl.BlockSpec((tk, tn), lambda i, j, k: (k, j)),   # w tile
                    pl.BlockSpec((1, tn), lambda i, j, k: (0, j)),    # bias
                ],
                out_specs=pl.BlockSpec((tm, tn), lambda i, j, k: (i, j)),
                scratch_shapes=[pltpu.VMEM((tm, tn), jnp.float32)],
            ),
            compiler_params=compiler_params,
            cost_estimate=cost,
        )(x2, w2, b2)

    out2 = out2[:m, :nf]
    return out2.reshape(*lead, nf)


if __name__ == "__main__":
    key = jax.random.PRNGKey(0)
    kx, kw, kb, kx2, kw2, kb2 = jax.random.split(key, 6)

    # Test 1: small shapes consistent with the module's forward:
    #   x: [batch, seq, nx], weight: [nx, nf], bias: [nf]
    batch, seq, nx, nf = 2, 8, 64, 128
    x = jax.random.normal(kx, (batch, seq, nx), dtype=jnp.float32)
    weight = jax.random.normal(kw, (nx, nf), dtype=jnp.float32) * 0.02
    bias = jax.random.normal(kb, (nf,), dtype=jnp.float32) * 0.02
    out = jax.block_until_ready(frozen_conv1d(x, weight, bias))
    ref = (x.reshape(-1, nx) @ weight + bias).reshape(batch, seq, nf)
    assert out.shape == (batch, seq, nf)
    assert jnp.allclose(out, ref, atol=1e-5, rtol=1e-5)

    # Test 2: odd, non-divisible shapes exercise the padding path.
    batch2, seq2, nxo, nfo = 3, 5, 48, 200
    xb = jax.random.normal(kx2, (batch2, seq2, nxo), dtype=jnp.float32)
    wb = jax.random.normal(kw2, (nxo, nfo), dtype=jnp.float32) * 0.02
    bb = jax.random.normal(kb2, (nfo,), dtype=jnp.float32) * 0.02
    out_b = jax.block_until_ready(frozen_conv1d(xb, wb, bb))
    ref_b = (xb.reshape(-1, nxo) @ wb + bb).reshape(batch2, seq2, nfo)
    assert out_b.shape == (batch2, seq2, nfo)
    assert jnp.allclose(out_b, ref_b, atol=1e-5, rtol=1e-5)

    # Test 3: force the K-tiled fallback path so it is also compiled/verified.
    out_c = jax.block_until_ready(
        frozen_conv1d(x, weight, bias, force_ktiled=True))
    assert jnp.allclose(out_c, ref, atol=1e-5, rtol=1e-5)

    print("KERNEL_OK")
</pallas_src>

<mosaic_0001>
module attributes {stable_mosaic.version = 11 : i64} {
  func.func @_conv1d_fullk_kernel(%arg0: i32, %arg1: i32, %arg2: memref<16x64xf32, #tpu.memory_space<vmem>>, %arg3: memref<64x128xf32, #tpu.memory_space<vmem>>, %arg4: memref<1x128xf32, #tpu.memory_space<vmem>>, %arg5: memref<16x128xf32, #tpu.memory_space<vmem>>) attributes {dimension_semantics = [#tpu.dimension_semantics<parallel>, #tpu.dimension_semantics<parallel>], iteration_bounds = array<i64: 1, 1>, scalar_prefetch = 0 : i64, scratch_operands = 0 : i64, tpu.core_type = #tpu.core_type<tc>, window_params = [{transform_indices = @transform_0, window_bounds = array<i64: 16, 64>}, {transform_indices = @transform_1, window_bounds = array<i64: 64, 128>}, {transform_indices = @transform_2, window_bounds = array<i64: 1, 128>}, {transform_indices = @transform_3, window_bounds = array<i64: 16, 128>}]} {
    %c0 = arith.constant 0 : index
    %c0_0 = arith.constant 0 : index
    %0 = vector.load %arg2[%c0, %c0_0] : memref<16x64xf32, #tpu.memory_space<vmem>>, vector<16x64xf32>
    %c0_1 = arith.constant 0 : index
    %c0_2 = arith.constant 0 : index
    %1 = vector.load %arg3[%c0_1, %c0_2] : memref<64x128xf32, #tpu.memory_space<vmem>>, vector<64x128xf32>
    %cst = arith.constant dense<0.000000e+00> : vector<16x128xf32>
    %2 = tpu.matmul %0, %1, %cst {dimension_numbers = #tpu.dot_dimension_numbers<[1], [0], [0], [1], [0, 0, 1, 1], [], []>} : vector<16x64xf32>, vector<64x128xf32>, vector<16x128xf32> -> vector<16x128xf32>
    %c0_3 = arith.constant 0 : index
    %c0_4 = arith.constant 0 : index
    %3 = vector.load %arg4[%c0_3, %c0_4] : memref<1x128xf32, #tpu.memory_space<vmem>>, vector<1x128xf32>
    %4 = vector.broadcast %3 : vector<1x128xf32> to vector<16x128xf32>
    %5 = arith.addf %2, %4 : vector<16x128xf32>
    %c0_5 = arith.constant 0 : index
    %c0_6 = arith.constant 0 : index
    %6 = vector.load %arg5[%c0_5, %c0_6] : memref<16x128xf32, #tpu.memory_space<vmem>>, vector<16x128xf32>
    tpu.vector_store %arg5[%c0_5, %c0_6], %5 {strides = array<i32>} : memref<16x128xf32, #tpu.memory_space<vmem>>, vector<16x128xf32>,
    return
  }
  func.func @transform_0(%arg0: i32, %arg1: i32) -> (i32, i32) {
    %c0_i32 = arith.constant 0 : i32
    %c0_i32_0 = arith.constant 0 : i32
    return %arg0, %c0_i32 : i32, i32
  }
  func.func @transform_1(%arg0: i32, %arg1: i32) -> (i32, i32) {
    %c0_i32 = arith.constant 0 : i32
    %c0_i32_0 = arith.constant 0 : i32
    return %c0_i32, %arg1 : i32, i32
  }
  func.func @transform_2(%arg0: i32, %arg1: i32) -> (i32, i32) {
    %c0_i32 = arith.constant 0 : i32
    %c0_i32_0 = arith.constant 0 : i32
    return %c0_i32, %arg1 : i32, i32
  }
  func.func @transform_3(%arg0: i32, %arg1: i32) -> (i32, i32) {
    %c0_i32 = arith.constant 0 : i32
    return %arg0, %arg1 : i32, i32
  }
}

</mosaic_0001>

<llo_original>
// kernel: frozen_conv1d.1
$region0: #{frozen_conv1d.1}
  #allocation0 [shape = 'u32[]', space=smem, size = 0x4, offset = 0x4, fixed_abs, tag = 'smem constant byte address 0x4 - core index']
  #allocation1 [shape = 'u32[144,128]{1,0:T(1,128)}', space=vmem, size = 0x12000, scoped, tag = 'internal scratch']
  %s0 = inlined_call_operand.hbm [shape: f32[16,64], index: 0, kind: input, shape index: {}]
  %s1 = inlined_call_operand.hbm [shape: f32[64,128], index: 1, kind: input, shape index: {}]
  %s2 = inlined_call_operand.vmem [shape: f32[1,128], index: 2, kind: input, shape index: {}]
  %s3 = inlined_call_operand.hbm [shape: f32[16,128], index: 3, kind: output, shape index: {}]
  %s4 = sld [smem:[#allocation0]]
  $region30: #{frozen_conv1d.1} parent=0
    _
  %s6 = ssub.s32 1, %s4
  %s7 = scalar_select 0, %s6, %s4
  $region1: #{frozen_conv1d.1} parent=0
    #allocation2 [shape = 'u8[8192]{0}', space=vmem, size = 0x2000, scoped, tag = 'input window, operand 0, single buffered']
    #allocation3 [shape = 's32[1]{0}', space=sflag, size = 0x4, scoped, tag = 'scoped memory for frozen_conv1d.1']
    #allocation4 [shape = 's32[1]{0}', space=sflag, size = 0x4, scoped, tag = 'scoped memory for frozen_conv1d.1']
    #allocation5 [shape = 'u8[32768]{0}', space=vmem, size = 0x8000, scoped, tag = 'input window, operand 1, single buffered']
    #allocation6 [shape = 's32[1]{0}', space=sflag, size = 0x4, scoped, tag = 'scoped memory for frozen_conv1d.1']
    #allocation7 [shape = 'u8[8192]{0}', space=vmem, size = 0x2000, scoped, tag = 'output window, operand 0, single buffered']
    %8 = vsyncpa [#allocation3], 0
    %9 = vsyncpa [#allocation6], 0
    %10 = vsyncpa [#allocation4], 0
    // Predicated region
    $region2: #{frozen_conv1d.1} parent=1 // pred_check
      _
    $region3: #{frozen_conv1d.1} parent=1 // pred_check_branch
      %12 = sbr.rel (0) target = $region5
    $region4: #{frozen_conv1d.1} parent=1 // pred_region
      %s14 = ssub.s32 256, 256
      %15 = vsyncadd [#allocation3], %s14
      %s16 = sshll.u32 [#allocation2], 4
      %s17 = int_to_ptr.vmem [resolvable:$true] %s16
      %22 = dma.hbm_to_vmem [thread:$0]  %s0, 256, %s17, [#allocation3], 128, 128, 8
    $region5: #{frozen_conv1d.1} parent=1 // pred_fallthru
      _
    // Predicated region
    $region6: #{frozen_conv1d.1} parent=1 // pred_check
      _
    $region7: #{frozen_conv1d.1} parent=1 // pred_check_branch
      %24 = sbr.rel (0) target = $region9
    $region8: #{frozen_conv1d.1} parent=1 // pred_region
      %s26 = ssub.s32 1024, 1024
      %27 = vsyncadd [#allocation6], %s26
      %s28 = sshll.u32 [#allocation5], 4
      %s29 = int_to_ptr.vmem [resolvable:$true] %s28
      %34 = dma.hbm_to_vmem [thread:$0]  %s1, 1024, %s29, [#allocation6], 128, 128, 8
    $region9: #{frozen_conv1d.1} parent=1 // pred_fallthru
      _
    // Predicated region
    $region10: #{frozen_conv1d.1} parent=1 // pred_check
      _
    $region11: #{frozen_conv1d.1} parent=1 // pred_check_branch
      %36 = sbr.rel (0) target = $region13
    $region12: #{frozen_conv1d.1} parent=1 // pred_region
      _
    $region13: #{frozen_conv1d.1} parent=1 // pred_fallthru
      _
    // Predicated region
    $region14: #{frozen_conv1d.1} parent=1 // pred_check
      _
    $region15: #{frozen_conv1d.1} parent=1 // pred_check_branch
      %38 = sbr.rel (0) target = $region17
    $region16: #{frozen_conv1d.1} parent=1 // pred_region
      %39 = dma.done [#allocation3], 256
    $region17: #{frozen_conv1d.1} parent=1 // pred_fallthru
      _
    // Predicated region
    $region18: #{frozen_conv1d.1} parent=1 // pred_check
      _
    $region19: #{frozen_conv1d.1} parent=1 // pred_check_branch
      %41 = sbr.rel (0) target = $region21
    $region20: #{frozen_conv1d.1} parent=1 // pred_region
      %42 = dma.done [#allocation6], 1024
    $region21: #{frozen_conv1d.1} parent=1 // pred_fallthru
      _
    %v43 = vld [vmem:[#allocation2] sm:$0xff]
    %v44 = vld [vmem:[#allocation2 + $0x8] sm:$0xff]
    %v45 = vld [vmem:[#allocation5] sm:$0xff]
    %v46 = vld [vmem:[#allocation5 + $0x8] sm:$0xff]
    %v47 = vld [vmem:[#allocation5 + $0x10] sm:$0xff]
    %v48 = vld [vmem:[#allocation5 + $0x18] sm:$0xff]
    %v49 = vld [vmem:[#allocation5 + $0x20] sm:$0xff]
    %v50 = vld [vmem:[#allocation5 + $0x28] sm:$0xff]
    %v51 = vld [vmem:[#allocation5 + $0x30] sm:$0xff]
    %v52 = vld [vmem:[#allocation5 + $0x38] sm:$0xff]
    %v53 = vld [vmem:[%s2] sm:$0x1]
    %v55 = vlaneseq
    %v56 = vshrl.u32 %v55, 7
    %v57 = vsub.s32 0, %v56
    %v58 = vrot.slane %v53, %v57
    %vm60 = vcmask 523264
    %v62 = vsel %vm60, %v43, 0
    %v65 = vsel %vm60, %v44, 0
    %67 = vmatprep.subr.mxu0 0.0
    %68 = vmatpush1.msra.mxu0 0.0
    %69 = vmatprep.subr.mxu0 0.0
    %70 = vmatpush1.msra.mxu0 0.0
    %71 = vmatprep.subr.mxu0 0.0
    %72 = vmatpush1.msra.mxu0 0.0
    %73 = vmatprep.subr.mxu0 0.0
    %74 = vmatpush1.msra.mxu0 0.0
    %75 = vmatprep.subr.mxu0 0.0
    %76 = vmatpush1.msra.mxu0 0.0
    %77 = vmatprep.subr.mxu0 0.0
    %78 = vmatpush1.msra.mxu0 0.0
    %79 = vmatprep.subr.mxu0 0.0
    %80 = vmatpush1.msra.mxu0 0.0
    %81 = vmatprep.subr.mxu0 0.0
    %82 = vmatpush1.msra.mxu0 0.0
    %83 = vmatprep.subr.mxu0 0.0
    %84 = vmatpush1.msra.mxu0 %v52
    %85 = vmatprep.subr.mxu0 0.0
    %86 = vmatpush1.msra.mxu0 %v51
    %87 = vmatprep.subr.mxu0 0.0
    %88 = vmatpush1.msra.mxu0 %v50
    %89 = vmatprep.subr.mxu0 0.0
    %90 = vmatpush1.msra.mxu0 %v49
    %91 = vmatprep.subr.mxu0 0.0
    %92 = vmatpush1.msra.mxu0 %v48
    %93 = vmatprep.subr.mxu0 0.0
    %94 = vmatpush1.msra.mxu0 %v47
    %95 = vmatprep.subr.mxu0 0.0
    %96 = vmatpush1.msra.mxu0 %v46
    %97 = vmatprep.subr.mxu0 0.0
    %98 = vmatpush1.msra.mxu0 %v45
    %99 = vmatprep.subr.mxu0 0.0
    %100 = vmatpush2.msra.mxu0 0.0
    %101 = vmatprep.subr.mxu0 0.0
    %102 = vmatpush2.msra.mxu0 0.0
    %103 = vmatprep.subr.mxu0 0.0
    %104 = vmatpush2.msra.mxu0 0.0
    %105 = vmatprep.subr.mxu0 0.0
    %106 = vmatpush2.msra.mxu0 0.0
    %107 = vmatprep.subr.mxu0 0.0
    %108 = vmatpush2.msra.mxu0 0.0
    %109 = vmatprep.subr.mxu0 0.0
    %110 = vmatpush2.msra.mxu0 0.0
    %111 = vmatprep.subr.mxu0 0.0
    %112 = vmatpush2.msra.mxu0 0.0
    %113 = vmatprep.subr.mxu0 0.0
    %114 = vmatpush2.msra.mxu0 0.0
    %115 = vmatprep.subr.mxu0 0.0
    %116 = vmatpush2.msra.mxu0 0.0
    %117 = vmatprep.subr.mxu0 0.0
    %118 = vmatpush2.msra.mxu0 0.0
    %119 = vmatprep.subr.mxu0 0.0
    %120 = vmatpush2.msra.mxu0 0.0
    %121 = vmatprep.subr.mxu0 0.0
    %122 = vmatpush2.msra.mxu0 0.0
    %123 = vmatprep.subr.mxu0 0.0
    %124 = vmatpush2.msra.mxu0 0.0
    %125 = vmatprep.subr.mxu0 0.0
    %126 = vmatpush2.msra.mxu0 0.0
    %127 = vmatprep.subr.mxu0 0.0
    %128 = vmatpush2.msra.mxu0 0.0
    %129 = vmatprep.subr.mxu0 0.0
    %130 = vmatpush2.msra.mxu0 0.0
    %131 = vmatprep.mubr.f32.mxu0 0.0
    %132 = vmatmul.mubr.f32.gmra.mxu0 %v62
    %v133 = vpop.f32.mrf.mxu0
    %v134 = vadd.f32 %v58, %v133
    %v135 = vpop.f32.mrf.mxu0
    %136 = vmatprep.mubr.f32.mxu0 0.0
    %137 = vmatmul.mubr.f32.gmra.mxu0 %v65
    %v138 = vpop.f32.mrf.mxu0
    %v139 = vadd.f32 %v58, %v138
    %v140 = vpop.f32.mrf.mxu0
    %141 = vdwg.mxu0
    %142 = vst [vmem:[#allocation7] sm:$0xff] %v134
    %143 = vst [vmem:[#allocation7 + $0x8] sm:$0xff] %v139
    // Predicated region
    $region22: #{frozen_conv1d.1} parent=1 // pred_check
      _
    $region23: #{frozen_conv1d.1} parent=1 // pred_check_branch
      %145 = sbr.rel (0) target = $region25
    $region24: #{frozen_conv1d.1} parent=1 // pred_region
      %s147 = ssub.s32 256, 256
      %148 = vsyncadd [#allocation4], %s147
      %s149 = sshll.u32 [#allocation7], 4
      %s150 = int_to_ptr.vmem [resolvable:$true] %s149
      %155 = dma.vmem_to_hbm [thread:$0]  %s150, 256, %s3, [#allocation4], 128, 128, 8
    $region25: #{frozen_conv1d.1} parent=1 // pred_fallthru
      _
    // Predicated region
    $region26: #{frozen_conv1d.1} parent=1 // pred_check
      _
    $region27: #{frozen_conv1d.1} parent=1 // pred_check_branch
      %157 = sbr.rel (0) target = $region29
    $region28: #{frozen_conv1d.1} parent=1 // pred_region
      %158 = dma.done [#allocation4], 256
    $region29: #{frozen_conv1d.1} parent=1 // pred_fallthru
      _
    %159 = vsyncpa [#allocation3], 1
    %160 = vsyncpa [#allocation6], 1
    %161 = vsyncpa [#allocation4], 1

</llo_original>
